<compile_context>
chip_gen: v6e
topology: v6e:2x2x1
jax: 0.10.0
libtpu: 0.0.40
codegen_flags: <defaults>
</compile_context>

<pallas_src>
import functools

import jax
import jax.numpy as jnp
from jax.experimental import pallas as pl
from jax.experimental.pallas import tpu as pltpu


# ----------------------------- kernel ----------------------------------------


def _softnn_kernel(*refs, inv_tau, has_ps, has_ns, pos_score, neg_score,
                   compute_dtype):
    """softnn / euclidean / non-inbatch loss for one (TM, D) tile.

    refs = (q_ref, p_ref, n_ref, [ps_ref], [ns_ref], out_ref)
    q/p/n: (TM, D) encoding tiles; ps/ns: optional (TM, 1) score tiles;
    out: (TM, 1) per-example loss.
    """
    it = iter(refs)
    q_ref = next(it)
    p_ref = next(it)
    n_ref = next(it)
    ps_ref = next(it) if has_ps else None
    ns_ref = next(it) if has_ns else None
    out_ref = next(it)

    # compute_dtype == f32: classic upcast-then-math path (safe everywhere).
    # compute_dtype == bf16 (with bf16 inputs): subtract/square in bf16 on the
    # VALU, accumulate the D-axis partial sums in f32 (v7x fast path).
    q = q_ref[...].astype(compute_dtype)
    p = p_ref[...].astype(compute_dtype)
    n = n_ref[...].astype(compute_dtype)

    dqp = q - p
    dqn = q - n
    pos_sq = jnp.sum((dqp * dqp).astype(jnp.float32), axis=-1, keepdims=True)
    neg_sq = jnp.sum((dqn * dqn).astype(jnp.float32), axis=-1, keepdims=True)

    pos_d = jnp.exp(-pos_sq * inv_tau)      # exp(-||q-p||^2 / tau), (TM, 1)
    neg_d = jnp.exp(-neg_sq * inv_tau)      # diag of the PyTorch (B,B) matrix

    ps = ps_ref[...] if has_ps else jnp.float32(pos_score)
    ns = ns_ref[...] if has_ns else jnp.float32(neg_score)

    # softnn (non-inbatch):
    #   loss = -(log(pos_d*ps + neg_diag*ns) - log(pos_d + neg_diag))
    # NOTE: matches the PyTorch formulation exactly (including its underflow
    # behaviour for very large distances); a logaddexp form would be more
    # robust but would change semantics in the underflow regime.
    numerator = jnp.log(pos_d * ps + neg_d * ns)
    denom = jnp.log(pos_d + neg_d)
    out_ref[...] = -(numerator - denom)


# ----------------------------- tiling heuristics ------------------------------


def _cdiv(a, b):
    return -(-a // b)


def _pick_block_rows(B, D, itemsize, *,
                     budget_bytes=12 << 20,    # live working-set budget / step
                     min_programs=8,           # keep >= this many grid steps
                     min_tile_bytes=1 << 20,   # per-input-stream tile floor
                     cap=2048):
    """Rows per tile.

    Live working set per row at one grid step:
      3 encoding inputs x 2 pipeline buffers x D x itemsize   (HBM->VMEM tiles)
    + ~6 x D x 4                                  (f32 upcasts / diffs / squares)
    The tile is additionally capped so the grid keeps >= min_programs steps
    (restores DMA/compute overlap and v7x megacore sharding), but never shrunk
    below ~min_tile_bytes of input per stream (keeps the ~0.35 us/step grid
    overhead amortized).
    """
    per_row_live = 3 * 2 * D * itemsize + 6 * D * 4
    tm_budget = max(8, budget_bytes // per_row_live)

    rows_floor = _cdiv(min_tile_bytes, D * itemsize)   # efficiency floor
    rows_for_steps = _cdiv(B, min_programs)            # >= min_programs steps

    tm = min(tm_budget, cap, max(rows_floor, rows_for_steps))
    tm = max(8, (tm // 8) * 8)                         # sublane multiple
    if tm >= B:
        return B      # whole (small) batch in one block — full dim always legal
    return tm


# ----------------------------- wrapper ----------------------------------------


def contrastive_triplet_loss(
    query_encodings,        # (B, 1, D) float32 or bfloat16
    pos_encodings,          # (B, 1, D)
    neg_encodings,          # (B, 1, D)
    pos_scores=None,        # optional (B,) / (B,1) float32, default scalar 1.0
    neg_scores=None,        # optional (B,) / (B,1) float32, default scalar 1e-18
    tau: float = 1.0,
    global_step: int = 0,   # unused in the default (non-inbatch) path
    block_rows: int = None,
    encodings_dtype=None,   # e.g. jnp.bfloat16 to halve HBM read traffic
    compute_dtype=None,     # default f32; jnp.bfloat16 enables bf16 VALU math
):
    del global_step
    q = jnp.asarray(query_encodings).squeeze(1)   # (B, D)
    p = jnp.asarray(pos_encodings).squeeze(1)
    n = jnp.asarray(neg_encodings).squeeze(1)
    if encodings_dtype is not None:
        q = q.astype(encodings_dtype)
        p = p.astype(encodings_dtype)
        n = n.astype(encodings_dtype)
    B, D = q.shape
    itemsize = jnp.dtype(q.dtype).itemsize
    cd = jnp.dtype(compute_dtype) if compute_dtype is not None else jnp.dtype(jnp.float32)

    inv_tau = 1.0 / float(tau)
    tm = block_rows if block_rows is not None else _pick_block_rows(B, D, itemsize)
    grid = (pl.cdiv(B, tm),)

    enc_spec = pl.BlockSpec((tm, D), lambda i: (i, 0))
    out_spec = pl.BlockSpec((tm, 1), lambda i: (i, 0))
    score_spec = pl.BlockSpec((tm, 1), lambda i: (i, 0))
    # TODO(synk): scores could be passed lane-dense as (1, B) tiles + an in-kernel
    # XLU transpose; kept (tm, 1) here since the streams are tiny and this layout
    # is proven to lower cleanly.

    has_ps = pos_scores is not None
    has_ns = neg_scores is not None

    inputs = [q, p, n]
    in_specs = [enc_spec, enc_spec, enc_spec]
    n_score_streams = 0
    if has_ps:
        inputs.append(jnp.asarray(pos_scores, jnp.float32).reshape(B, 1))
        in_specs.append(score_spec)
        n_score_streams += 1
    if has_ns:
        inputs.append(jnp.asarray(neg_scores, jnp.float32).reshape(B, 1))
        in_specs.append(score_spec)
        n_score_streams += 1

    # VMEM footprint: double-buffered input/score/output tiles + in-kernel
    # f32-equivalent temporaries.  Margin added, capped at 32 MiB (v7x-safe).
    vmem_needed = (3 * 2 * tm * D * itemsize
                   + n_score_streams * 2 * tm * 4
                   + 2 * tm * 4
                   + 6 * tm * D * 4)
    vmem_limit = max(16 << 20, min(32 << 20, int(1.5 * vmem_needed) + (2 << 20)))
    vmem_limit = max(vmem_limit, vmem_needed + (1 << 20))   # never under-provision

    compiler_params = pltpu.CompilerParams(
        dimension_semantics=("parallel",),     # megacore sharding on v7x
        vmem_limit_bytes=int(vmem_limit),
    )

    kernel = functools.partial(
        _softnn_kernel,
        inv_tau=inv_tau, has_ps=has_ps, has_ns=has_ns,
        pos_score=1.0, neg_score=1e-18, compute_dtype=cd)

    out = pl.pallas_call(
        kernel,
        out_shape=jax.ShapeDtypeStruct((B, 1), jnp.float32),
        grid=grid,
        in_specs=in_specs,
        out_specs=out_spec,
        compiler_params=compiler_params,
    )(*inputs)

    return out[:, 0]   # (B,) — matches the PyTorch per-example loss vector


# TODO(synk): inbatch_negatives / marginmse / cosine / dot branches not wired up;
# only the default (euclidean, softnn, no in-batch negatives) path is implemented.


# ----------------------------- reference & test -------------------------------


def _reference_loss(query, pos, neg, pos_scores=None, neg_scores=None, tau=1.0):
    # Pure-JAX transcription of the PyTorch forward (euclidean/softnn, no inbatch).
    q = jnp.asarray(query, jnp.float32).squeeze(1)
    p = jnp.asarray(pos, jnp.float32).squeeze(1)
    n = jnp.asarray(neg, jnp.float32).squeeze(1)
    B = q.shape[0]
    ps = jnp.float32(1.0) if pos_scores is None else jnp.asarray(pos_scores, jnp.float32).reshape(B)
    ns = jnp.float32(1e-18) if neg_scores is None else jnp.asarray(neg_scores, jnp.float32).reshape(B)
    pos_d = jnp.exp(-jnp.sum((q - p) ** 2, axis=-1) / tau)
    # full (B,B) matrix then diag — exactly as written in PyTorch
    neg_full = jnp.exp(-jnp.sum((q[:, None, :] - n[None, :, :]) ** 2, -1) / tau)
    neg_diag = jnp.diagonal(neg_full)
    numerator = jnp.log(pos_d * ps + neg_diag * ns)
    denom = jnp.log(pos_d + neg_diag)
    return -1.0 * (numerator - denom)


if __name__ == "__main__":
    key = jax.random.PRNGKey(0)

    # --- test 1: default scores, single small block ---------------------------
    B, D = 8, 128
    kq, kp, kn, kps, kns = jax.random.split(key, 5)
    query = jax.random.normal(kq, (B, 1, D), dtype=jnp.float32)
    pos = query + 0.1 * jax.random.normal(kp, (B, 1, D), dtype=jnp.float32)
    neg = jax.random.normal(kn, (B, 1, D), dtype=jnp.float32)

    loss = jax.block_until_ready(contrastive_triplet_loss(query, pos, neg, tau=1.0))
    ref = _reference_loss(query, pos, neg, tau=1.0)
    assert loss.shape == (B,)
    assert jnp.allclose(loss, ref, rtol=1e-5, atol=1e-5), (loss, ref)

    # --- test 2: explicit pos/neg scores (two score DMA streams) --------------
    pos_scores = jax.random.uniform(kps, (B,), jnp.float32, 0.5, 1.5)
    neg_scores = jax.random.uniform(kns, (B,), jnp.float32, 0.1, 0.2)
    loss2 = jax.block_until_ready(
        contrastive_triplet_loss(query, pos, neg, pos_scores, neg_scores, tau=1.0))
    ref2 = _reference_loss(query, pos, neg, pos_scores, neg_scores, tau=1.0)
    assert jnp.allclose(loss2, ref2, rtol=1e-5, atol=1e-5), (loss2, ref2)

    # --- test 3: only neg_scores provided (pos baked as constant, 1 stream) ---
    loss2b = jax.block_until_ready(
        contrastive_triplet_loss(query, pos, neg, None, neg_scores, tau=1.0))
    ref2b = _reference_loss(query, pos, neg, None, neg_scores, tau=1.0)
    assert jnp.allclose(loss2b, ref2b, rtol=1e-5, atol=1e-5), (loss2b, ref2b)

    # --- test 4: multi-block grid (exercises batch tiling / pipelining) -------
    B3, D3 = 32, 256
    k1, k2, k3 = jax.random.split(jax.random.PRNGKey(1), 3)
    q3 = jax.random.normal(k1, (B3, 1, D3), dtype=jnp.float32)
    p3 = q3 + 0.05 * jax.random.normal(k2, (B3, 1, D3), dtype=jnp.float32)
    n3 = jax.random.normal(k3, (B3, 1, D3), dtype=jnp.float32)
    loss3 = jax.block_until_ready(
        contrastive_triplet_loss(q3, p3, n3, tau=0.5, block_rows=8))
    ref3 = _reference_loss(q3, p3, n3, tau=0.5)
    assert loss3.shape == (B3,)
    assert jnp.allclose(loss3, ref3, rtol=1e-5, atol=1e-5), (loss3, ref3)

    # --- test 5: bf16 encodings + bf16 VALU math (v7x fast path) --------------
    k4, k5, k6 = jax.random.split(jax.random.PRNGKey(2), 3)
    q4 = jax.random.normal(k4, (B, 1, D), dtype=jnp.float32)
    p4 = q4 + 0.1 * jax.random.normal(k5, (B, 1, D), dtype=jnp.float32)
    n4 = q4 + 0.2 * jax.random.normal(k6, (B, 1, D), dtype=jnp.float32)
    q4b, p4b, n4b = (x.astype(jnp.bfloat16) for x in (q4, p4, n4))
    loss4 = jax.block_until_ready(
        contrastive_triplet_loss(q4b, p4b, n4b, tau=4.0,
                                 encodings_dtype=jnp.bfloat16,
                                 compute_dtype=jnp.bfloat16))
    ref4 = _reference_loss(q4b, p4b, n4b, tau=4.0)
    assert loss4.shape == (B,)
    assert jnp.allclose(loss4, ref4, rtol=5e-2, atol=5e-2), (loss4, ref4)

    print("KERNEL_OK")
</pallas_src>

<mosaic_0001>
module attributes {stable_mosaic.version = 11 : i64} {
  func.func @_softnn_kernel(%arg0: i32, %arg1: memref<8x128xf32, #tpu.memory_space<vmem>>, %arg2: memref<8x128xf32, #tpu.memory_space<vmem>>, %arg3: memref<8x128xf32, #tpu.memory_space<vmem>>, %arg4: memref<8x1xf32, #tpu.memory_space<vmem>>) attributes {dimension_semantics = [#tpu.dimension_semantics<parallel>], iteration_bounds = array<i64: 1>, scalar_prefetch = 0 : i64, scratch_operands = 0 : i64, tpu.core_type = #tpu.core_type<tc>, window_params = [{transform_indices = @transform_0, window_bounds = array<i64: 8, 128>}, {transform_indices = @transform_1, window_bounds = array<i64: 8, 128>}, {transform_indices = @transform_2, window_bounds = array<i64: 8, 128>}, {transform_indices = @transform_3, window_bounds = array<i64: 8, 1>}]} {
    %c0 = arith.constant 0 : index
    %c0_0 = arith.constant 0 : index
    %0 = vector.load %arg1[%c0, %c0_0] : memref<8x128xf32, #tpu.memory_space<vmem>>, vector<8x128xf32>
    %c0_1 = arith.constant 0 : index
    %c0_2 = arith.constant 0 : index
    %1 = vector.load %arg2[%c0_1, %c0_2] : memref<8x128xf32, #tpu.memory_space<vmem>>, vector<8x128xf32>
    %c0_3 = arith.constant 0 : index
    %c0_4 = arith.constant 0 : index
    %2 = vector.load %arg3[%c0_3, %c0_4] : memref<8x128xf32, #tpu.memory_space<vmem>>, vector<8x128xf32>
    %3 = arith.subf %0, %1 : vector<8x128xf32>
    %4 = arith.subf %0, %2 : vector<8x128xf32>
    %5 = arith.mulf %3, %3 : vector<8x128xf32>
    %cst = arith.constant dense<0.000000e+00> : vector<8xf32>
    %6 = vector.multi_reduction <add>, %5, %cst [1] : vector<8x128xf32> to vector<8xf32>
    %7 = vector.shape_cast %6 : vector<8xf32> to vector<8x1xf32>
    %8 = arith.mulf %4, %4 : vector<8x128xf32>
    %cst_5 = arith.constant dense<0.000000e+00> : vector<8xf32>
    %9 = vector.multi_reduction <add>, %8, %cst_5 [1] : vector<8x128xf32> to vector<8xf32>
    %10 = vector.shape_cast %9 : vector<8xf32> to vector<8x1xf32>
    %cst_6 = arith.constant 0.000000e+00 : f32
    %11 = vector.broadcast %cst_6 : f32 to vector<8x1xf32>
    %12 = arith.subf %11, %7 : vector<8x1xf32>
    %cst_7 = arith.constant 1.000000e+00 : f32
    %13 = vector.broadcast %cst_7 : f32 to vector<8x1xf32>
    %14 = arith.mulf %12, %13 : vector<8x1xf32>
    %15 = math.exp %14 : vector<8x1xf32>
    %cst_8 = arith.constant 0.000000e+00 : f32
    %16 = vector.broadcast %cst_8 : f32 to vector<8x1xf32>
    %17 = arith.subf %16, %10 : vector<8x1xf32>
    %cst_9 = arith.constant 1.000000e+00 : f32
    %18 = vector.broadcast %cst_9 : f32 to vector<8x1xf32>
    %19 = arith.mulf %17, %18 : vector<8x1xf32>
    %20 = math.exp %19 : vector<8x1xf32>
    %cst_10 = arith.constant 1.000000e+00 : f32
    %21 = vector.broadcast %cst_10 : f32 to vector<8x1xf32>
    %22 = arith.mulf %15, %21 : vector<8x1xf32>
    %cst_11 = arith.constant 1.000000e-18 : f32
    %23 = vector.broadcast %cst_11 : f32 to vector<8x1xf32>
    %24 = arith.mulf %20, %23 : vector<8x1xf32>
    %25 = arith.addf %22, %24 : vector<8x1xf32>
    %26 = math.log %25 : vector<8x1xf32>
    %27 = arith.addf %15, %20 : vector<8x1xf32>
    %28 = math.log %27 : vector<8x1xf32>
    %29 = arith.subf %26, %28 : vector<8x1xf32>
    %cst_12 = arith.constant 0.000000e+00 : f32
    %30 = vector.broadcast %cst_12 : f32 to vector<8x1xf32>
    %31 = arith.subf %30, %29 : vector<8x1xf32>
    %c0_13 = arith.constant 0 : index
    %c0_14 = arith.constant 0 : index
    %32 = vector.load %arg4[%c0_13, %c0_14] : memref<8x1xf32, #tpu.memory_space<vmem>>, vector<8x1xf32>
    tpu.vector_store %arg4[%c0_13, %c0_14], %31 {strides = array<i32>} : memref<8x1xf32, #tpu.memory_space<vmem>>, vector<8x1xf32>,
    return
  }
  func.func @transform_0(%arg0: i32) -> (i32, i32) {
    %c0_i32 = arith.constant 0 : i32
    %c0_i32_0 = arith.constant 0 : i32
    return %arg0, %c0_i32 : i32, i32
  }
  func.func @transform_1(%arg0: i32) -> (i32, i32) {
    %c0_i32 = arith.constant 0 : i32
    %c0_i32_0 = arith.constant 0 : i32
    return %arg0, %c0_i32 : i32, i32
  }
  func.func @transform_2(%arg0: i32) -> (i32, i32) {
    %c0_i32 = arith.constant 0 : i32
    %c0_i32_0 = arith.constant 0 : i32
    return %arg0, %c0_i32 : i32, i32
  }
  func.func @transform_3(%arg0: i32) -> (i32, i32) {
    %c0_i32 = arith.constant 0 : i32
    %c0_i32_0 = arith.constant 0 : i32
    return %arg0, %c0_i32 : i32, i32
  }
}

</mosaic_0001>

<llo_original>
// kernel: tpu_custom_call.1
$region0: #{tpu_custom_call.1}
  #allocation0 [shape = 'u32[]', space=smem, size = 0x4, offset = 0x4, fixed_abs, tag = 'smem constant byte address 0x4 - core index']
  #allocation1 [shape = 'u32[144,128]{1,0:T(1,128)}', space=vmem, size = 0x12000, scoped, tag = 'internal scratch']
  %s0 = inlined_call_operand.hbm [shape: f32[8,128], index: 0, kind: input, shape index: {}]
  %s1 = inlined_call_operand.hbm [shape: f32[8,128], index: 1, kind: input, shape index: {}]
  %s2 = inlined_call_operand.hbm [shape: f32[8,128], index: 2, kind: input, shape index: {}]
  %s3 = inlined_call_operand.vmem [shape: f32[8,1], index: 3, kind: output, shape index: {}]
  %s4 = sld [smem:[#allocation0]]
  $region34: #{tpu_custom_call.1} parent=0
    _
  %s6 = ssub.s32 1, %s4
  %s7 = scalar_select 0, %s6, %s4
  $region1: #{tpu_custom_call.1} parent=0
    #allocation2 [shape = 'u8[4096]{0}', space=vmem, size = 0x1000, scoped, tag = 'input window, operand 0, single buffered']
    #allocation3 [shape = 's32[1]{0}', space=sflag, size = 0x4, scoped, tag = 'scoped memory for tpu_custom_call.1']
    #allocation4 [shape = 'u8[4096]{0}', space=vmem, size = 0x1000, scoped, tag = 'input window, operand 1, single buffered']
    #allocation5 [shape = 's32[1]{0}', space=sflag, size = 0x4, scoped, tag = 'scoped memory for tpu_custom_call.1']
    #allocation6 [shape = 'u8[4096]{0}', space=vmem, size = 0x1000, scoped, tag = 'input window, operand 2, single buffered']
    %8 = vsyncpa [#allocation3], 0
    %9 = vsyncpa [#allocation5], 0
    // Predicated region
    $region2: #{tpu_custom_call.1} parent=1 // pred_check
      _
    $region3: #{tpu_custom_call.1} parent=1 // pred_check_branch
      %11 = sbr.rel (0) target = $region5
    $region4: #{tpu_custom_call.1} parent=1 // pred_region
      %s13 = ssub.s32 128, 128
      %14 = vsyncadd [#allocation3], %s13
      %s16 = sshll.u32 [#allocation2], 4
      %s17 = int_to_ptr.vmem [resolvable:$true] %s16
      %19 = dma.hbm_to_vmem [thread:$0]  %s0, 128, %s17, [#allocation3]
    $region5: #{tpu_custom_call.1} parent=1 // pred_fallthru
      _
    // Predicated region
    $region6: #{tpu_custom_call.1} parent=1 // pred_check
      _
    $region7: #{tpu_custom_call.1} parent=1 // pred_check_branch
      %21 = sbr.rel (0) target = $region9
    $region8: #{tpu_custom_call.1} parent=1 // pred_region
      %s23 = ssub.s32 128, 128
      %24 = vsyncadd [#allocation5], %s23
      %s26 = sshll.u32 [#allocation4], 4
      %s27 = int_to_ptr.vmem [resolvable:$true] %s26
      %29 = dma.hbm_to_vmem [thread:$0]  %s1, 128, %s27, [#allocation5]
    $region9: #{tpu_custom_call.1} parent=1 // pred_fallthru
      _
    // Predicated region
    $region10: #{tpu_custom_call.1} parent=1 // pred_check
      _
    $region11: #{tpu_custom_call.1} parent=1 // pred_check_branch
      %31 = sbr.rel (0) target = $region13
    $region12: #{tpu_custom_call.1} parent=1 // pred_region
      %s33 = ssub.s32 128, 128
      %34 = vsyncadd [#allocation5], %s33
      %s36 = sshll.u32 [#allocation6], 4
      %s37 = int_to_ptr.vmem [resolvable:$true] %s36
      %39 = dma.hbm_to_vmem [thread:$0]  %s2, 128, %s37, [#allocation5]
    $region13: #{tpu_custom_call.1} parent=1 // pred_fallthru
      _
    // Predicated region
    $region14: #{tpu_custom_call.1} parent=1 // pred_check
      _
    $region15: #{tpu_custom_call.1} parent=1 // pred_check_branch
      %41 = sbr.rel (0) target = $region17
    $region16: #{tpu_custom_call.1} parent=1 // pred_region
      %42 = dma.done [#allocation3], 128
    $region17: #{tpu_custom_call.1} parent=1 // pred_fallthru
      _
    // Predicated region
    $region18: #{tpu_custom_call.1} parent=1 // pred_check
      _
    $region19: #{tpu_custom_call.1} parent=1 // pred_check_branch
      %44 = sbr.rel (0) target = $region21
    $region20: #{tpu_custom_call.1} parent=1 // pred_region
      %45 = dma.done [#allocation5], 128
    $region21: #{tpu_custom_call.1} parent=1 // pred_fallthru
      _
    // Predicated region
    $region22: #{tpu_custom_call.1} parent=1 // pred_check
      _
    $region23: #{tpu_custom_call.1} parent=1 // pred_check_branch
      %47 = sbr.rel (0) target = $region25
    $region24: #{tpu_custom_call.1} parent=1 // pred_region
      %48 = dma.done [#allocation5], 128
    $region25: #{tpu_custom_call.1} parent=1 // pred_fallthru
      _
    %v49 = vld [vmem:[#allocation2] sm:$0xff]
    %v50 = vld [vmem:[#allocation4] sm:$0xff]
    %v51 = vld [vmem:[#allocation6] sm:$0xff]
    %v52 = vsub.f32 %v49, %v50
    %v53 = vsub.f32 %v49, %v51
    %v54 = vmul.f32 %v52, %v52
    %55 = vadd.xlane.f32.xlu0 %v54
    %v56 = vpop.xlane.xlu0 %55
    %v57 = vmul.f32 %v53, %v53
    %58 = vadd.xlane.f32.xlu0 %v57
    %v59 = vpop.xlane.xlu0 %58
    %v60 = vsub.f32 0.0, %v56
    %v61 = vmul.f32 %v60, 1.442695
    %v62 = vpow.pop %v61
    %v63 = vsub.f32 0.0, %v59
    %v64 = vmul.f32 %v63, 1.442695
    %v65 = vpow.pop %v64
    %v66 = vmul.f32 %v65, 1e-18
    %v67 = vadd.f32 %v62, %v66
    %v68 = vlog2.pop %v67
    %v69 = vmul.f32 %v68, 0.6931472
    %v70 = vadd.f32 %v62, %v65
    %v71 = vlog2.pop %v70
    %v72 = vmul.f32 %v71, 0.6931472
    %v73 = vsub.f32 %v69, %v72
    %v74 = vsub.f32 0.0, %v73
    %vm75 = vcmask 7168
    %76 = vst.msk [vmem:[%s3] sm:$0xff] %vm75, %v74
    // Predicated region
    $region26: #{tpu_custom_call.1} parent=1 // pred_check
      _
    $region27: #{tpu_custom_call.1} parent=1 // pred_check_branch
      %78 = sbr.rel (0) target = $region29
    $region28: #{tpu_custom_call.1} parent=1 // pred_region
      _
    $region29: #{tpu_custom_call.1} parent=1 // pred_fallthru
      _
    // Predicated region
    $region30: #{tpu_custom_call.1} parent=1 // pred_check
      _
    $region31: #{tpu_custom_call.1} parent=1 // pred_check_branch
      %80 = sbr.rel (0) target = $region33
    $region32: #{tpu_custom_call.1} parent=1 // pred_region
      _
    $region33: #{tpu_custom_call.1} parent=1 // pred_fallthru
      _
    %81 = vsyncpa [#allocation3], 1
    %82 = vsyncpa [#allocation5], 1

</llo_original>
